<compile_context>
chip_gen: v7x
topology: tpu7x:2x2x1
jax: 0.10.0
libtpu: 0.0.40
codegen_flags: <defaults>
</compile_context>

<pallas_src>
import functools

import jax
import jax.numpy as jnp
from jax.experimental import pallas as pl
from jax.experimental.pallas import tpu as pltpu


def _cdiv(a, b):
    return -(-a // b)


def _round_up(n, m):
    return _cdiv(n, m) * m


# ------------------------------------------------------------------ kernel ---
def autoencoder_kernel(x_ref,
                       w1, b1, w2, b2, w3, b3,     # encoder (BN folded into w/b)
                       w4, b4, w5, b5, w6, b6,     # decoder (BN folded into w/b)
                       o_ref):
    x = x_ref[...]

    def linear(h, w_ref, b_ref):
        # Cast activations to the weight dtype (bf16 by default) for the MXU;
        # accumulate in f32; bias add / ReLU happen in f32 on the VPU.
        return jnp.dot(h.astype(w_ref.dtype), w_ref[...],
                       preferred_element_type=jnp.float32) + b_ref[...]

    relu = lambda h: jnp.maximum(h, 0.0)

    # ---- encoder: (Linear + folded-BN + ReLU [+ Dropout=id]) x2, Linear -> latent
    h = relu(linear(x, w1, b1))
    h = relu(linear(h, w2, b2))
    z = linear(h, w3, b3)
    # ---- decoder: (Linear + folded-BN + ReLU) x2, Linear + Sigmoid
    h = relu(linear(z, w4, b4))
    h = relu(linear(h, w5, b5))
    y = linear(h, w6, b6)
    # Sigmoid = 1 / (1 + exp(-y)): exp and approx reciprocal both go to the EUP
    # slot (free-ish filler in this HBM-bound kernel).
    o_ref[...] = pl.reciprocal(1.0 + jnp.exp(-y), approx=True).astype(o_ref.dtype)


# ----------------------------------------------------------------- wrapper ---
@functools.partial(jax.jit, static_argnames=("block_batch", "io_dtype"))
def autoencoder_forward(x, *folded_params, block_batch=4096, io_dtype=jnp.bfloat16):
    """Fused autoencoder forward. `folded_params` = (w1, b1, ..., w6, b6) from
    fold_params(). x/out are streamed in `io_dtype` (bf16 by default)."""
    B, D = x.shape
    x = x.astype(io_dtype)

    # --- balanced batch tiling -------------------------------------------
    ALIGN = 16  # bf16 sublane packing (also a multiple of the f32 requirement)
    # >= ceil(B/block_batch) steps; and >= 2 steps (when B allows) so the
    # "parallel" batch axis splits across both TensorCores on v7x.
    steps = max(_cdiv(B, block_batch), 2 if B >= 2 * ALIGN else 1)
    TB = _round_up(_cdiv(B, steps), ALIGN)
    Bp = _round_up(B, TB)
    if Bp != B:
        x = jnp.pad(x, ((0, Bp - B), (0, 0)))
    grid = (Bp // TB,)

    # --- VMEM budget (streamed bufs are double-buffered; intermediates live
    #     in compiler VMEM scratch at ~TB * sum(layer_widths) * 4 bytes) ------
    io_size = jnp.dtype(io_dtype).itemsize
    stream_bytes = 2 * TB * D * io_size * 2                      # x in + out, 2-deep
    layer_widths = [b.shape[-1] for b in folded_params[1::2]]     # 64,32,16,32,64,128
    scratch_bytes = TB * sum(layer_widths) * 4                    # f32 intermediates
    weight_bytes = sum(int(p.size) * jnp.dtype(p.dtype).itemsize
                       for p in folded_params)
    vmem_bytes = int(1.35 * (stream_bytes + scratch_bytes + 2 * weight_bytes)) + (2 << 20)
    vmem_bytes = min(max(vmem_bytes, 16 << 20), 48 << 20)         # <= v7x 64 MiB phys

    # --- cost hint so XLA treats this as the mem-bound op it is ------------
    flops = 2 * Bp * sum(w.shape[0] * w.shape[1] for w in folded_params[0::2])
    cost = pl.CostEstimate(
        flops=int(flops),
        transcendentals=int(2 * Bp * D),                          # exp + recip
        bytes_accessed=int(2 * Bp * D * io_size + weight_bytes))

    act_spec = pl.BlockSpec((TB, D), lambda i: (i, 0))
    # Weights / biases: full-array blocks with a constant index map -> DMA'd
    # once, resident in VMEM across all grid steps.
    const_specs = [pl.BlockSpec(p.shape, lambda i: (0, 0)) for p in folded_params]

    out = pl.pallas_call(
        autoencoder_kernel,
        out_shape=jax.ShapeDtypeStruct((Bp, D), io_dtype),
        grid=grid,
        in_specs=[act_spec] + const_specs,
        out_specs=act_spec,
        compiler_params=pltpu.CompilerParams(
            dimension_semantics=("parallel",),
            vmem_limit_bytes=vmem_bytes),
        cost_estimate=cost,
    )(x, *folded_params)
    return out[:B] if Bp != B else out


# -------------------------------------------------------------- parameters ---
def make_params(key, input_dim=128, hidden_dims=(64, 32), latent_dim=16, eps=1e-5):
    """PyTorch-style Linear init (U[-1/sqrt(fan_in), 1/sqrt(fan_in)]) plus
    random-but-deterministic BatchNorm1d running stats / affine params."""
    dims_enc = [input_dim, *hidden_dims, latent_dim]            # 128, 64, 32, 16
    dims_dec = [latent_dim, *reversed(hidden_dims), input_dim]  # 16, 32, 64, 128

    def linear_init(k, fan_in, fan_out):
        k1, k2 = jax.random.split(k)
        bound = 1.0 / jnp.sqrt(fan_in)
        w = jax.random.uniform(k1, (fan_in, fan_out), jnp.float32, -bound, bound)
        b = jax.random.uniform(k2, (1, fan_out), jnp.float32, -bound, bound)
        return w, b

    def bn_init(k, dim):
        k1, k2, k3, k4 = jax.random.split(k, 4)
        gamma = 1.0 + 0.1 * jax.random.normal(k1, (1, dim), jnp.float32)
        beta = 0.1 * jax.random.normal(k2, (1, dim), jnp.float32)
        mean = 0.1 * jax.random.normal(k3, (1, dim), jnp.float32)
        var = jnp.abs(1.0 + 0.1 * jax.random.normal(k4, (1, dim), jnp.float32))
        return gamma, beta, mean, var

    keys = iter(jax.random.split(key, 12))
    layers = []
    for i in range(len(hidden_dims)):                           # encoder hidden
        w, b = linear_init(next(keys), dims_enc[i], dims_enc[i + 1])
        g, be, m, v = bn_init(next(keys), dims_enc[i + 1])
        layers.append(dict(w=w, b=b, gamma=g, beta=be, mean=m, var=v, eps=eps))
    w, b = linear_init(next(keys), dims_enc[-2], dims_enc[-1])  # latent (no BN/act)
    layers.append(dict(w=w, b=b))
    for i in range(len(hidden_dims)):                           # decoder hidden
        w, b = linear_init(next(keys), dims_dec[i], dims_dec[i + 1])
        g, be, m, v = bn_init(next(keys), dims_dec[i + 1])
        layers.append(dict(w=w, b=b, gamma=g, beta=be, mean=m, var=v, eps=eps))
    w, b = linear_init(next(keys), dims_dec[-2], dims_dec[-1])  # output (Sigmoid)
    layers.append(dict(w=w, b=b))
    return layers


def fold_params(layers, dtype=jnp.bfloat16):
    """Fold eval-mode BatchNorm1d into the preceding Linear (mathematically exact).
    Returns the flat (w1, b1, ..., w6, b6) operand list for the kernel.
    Weights default to bf16 (bf16-native MXU on v5e/v6e/v7x keeps the kernel
    HBM-bound); folding math is done in f32 and biases stay f32."""
    flat = []
    for lyr in layers:
        w, b = lyr["w"], lyr["b"]
        if "gamma" in lyr:
            scale = lyr["gamma"] * jax.lax.rsqrt(lyr["var"] + lyr["eps"])
            shift = lyr["beta"] - lyr["mean"] * scale
            w = w * scale                 # (in, out) * (1, out)
            b = b * scale + shift
        flat += [w.astype(dtype), b.astype(jnp.float32)]
    return flat


# -------------------------------------------------------------- reference ---
def reference_forward(x, layers):
    """Pure-JAX eval-mode reference with *unfolded* BatchNorm (PyTorch semantics)."""
    h = x
    for lyr in layers:
        h = h @ lyr["w"] + lyr["b"]
        if "gamma" in lyr:
            h = (h - lyr["mean"]) * lyr["gamma"] * jax.lax.rsqrt(lyr["var"] + lyr["eps"]) + lyr["beta"]
            h = jnp.maximum(h, 0.0)       # ReLU; Dropout is identity in eval
    return jax.nn.sigmoid(h)              # output activation: Sigmoid


# ------------------------------------------------------------------- main ---
if __name__ == "__main__":
    key = jax.random.PRNGKey(0)
    k_x, k_p = jax.random.split(key)

    batch, input_dim = 20, 128            # small demo; production uses block_batch=4096
    x = jax.random.uniform(k_x, (batch, input_dim), jnp.float32)  # CIDDS features in [0,1]
    layers = make_params(k_p, input_dim=input_dim, hidden_dims=(64, 32), latent_dim=16)
    ref = reference_forward(x, layers)

    # --- f32 path: validates the fused math / BN folding tightly ------------
    folded_f32 = fold_params(layers, dtype=jnp.float32)
    out_f32 = autoencoder_forward(x, *folded_f32, block_batch=16, io_dtype=jnp.float32)
    out_f32 = jax.block_until_ready(out_f32).astype(jnp.float32)
    assert out_f32.shape == (batch, input_dim), out_f32.shape
    err_f32 = float(jnp.max(jnp.abs(out_f32 - ref)))
    assert err_f32 < 5e-3, f"f32 path error too large: {err_f32}"

    # --- bf16 default path (production config: bf16 weights + bf16 I/O) -----
    # Looser tolerance: expected bf16 quantization error, not a kernel bug.
    folded_bf16 = fold_params(layers)                      # default dtype=bf16
    out_bf16 = autoencoder_forward(x, *folded_bf16, block_batch=16)  # default io bf16
    out_bf16 = jax.block_until_ready(out_bf16).astype(jnp.float32)
    assert out_bf16.shape == (batch, input_dim), out_bf16.shape
    err_bf16 = float(jnp.max(jnp.abs(out_bf16 - ref)))
    assert err_bf16 < 5e-2, f"bf16 path error too large: {err_bf16}"

    print("KERNEL_OK")
</pallas_src>

<mosaic_0001>
module attributes {stable_mosaic.version = 11 : i64} {
  func.func @autoencoder_kernel(%arg0: i32, %arg1: memref<16x128xf32, #tpu.memory_space<vmem>>, %arg2: memref<128x64xf32, #tpu.memory_space<vmem>>, %arg3: memref<1x64xf32, #tpu.memory_space<vmem>>, %arg4: memref<64x32xf32, #tpu.memory_space<vmem>>, %arg5: memref<1x32xf32, #tpu.memory_space<vmem>>, %arg6: memref<32x16xf32, #tpu.memory_space<vmem>>, %arg7: memref<1x16xf32, #tpu.memory_space<vmem>>, %arg8: memref<16x32xf32, #tpu.memory_space<vmem>>, %arg9: memref<1x32xf32, #tpu.memory_space<vmem>>, %arg10: memref<32x64xf32, #tpu.memory_space<vmem>>, %arg11: memref<1x64xf32, #tpu.memory_space<vmem>>, %arg12: memref<64x128xf32, #tpu.memory_space<vmem>>, %arg13: memref<1x128xf32, #tpu.memory_space<vmem>>, %arg14: memref<16x128xf32, #tpu.memory_space<vmem>>) attributes {dimension_semantics = [#tpu.dimension_semantics<parallel>], iteration_bounds = array<i64: 2>, scalar_prefetch = 0 : i64, scratch_operands = 0 : i64, tpu.core_type = #tpu.core_type<tc>, window_params = [{transform_indices = @transform_0, window_bounds = array<i64: 16, 128>}, {pipeline_mode = #tpu.pipeline_mode<synchronous>, transform_indices = @transform_1, window_bounds = array<i64: 128, 64>}, {pipeline_mode = #tpu.pipeline_mode<synchronous>, transform_indices = @transform_2, window_bounds = array<i64: 1, 64>}, {pipeline_mode = #tpu.pipeline_mode<synchronous>, transform_indices = @transform_3, window_bounds = array<i64: 64, 32>}, {pipeline_mode = #tpu.pipeline_mode<synchronous>, transform_indices = @transform_4, window_bounds = array<i64: 1, 32>}, {pipeline_mode = #tpu.pipeline_mode<synchronous>, transform_indices = @transform_5, window_bounds = array<i64: 32, 16>}, {pipeline_mode = #tpu.pipeline_mode<synchronous>, transform_indices = @transform_6, window_bounds = array<i64: 1, 16>}, {pipeline_mode = #tpu.pipeline_mode<synchronous>, transform_indices = @transform_7, window_bounds = array<i64: 16, 32>}, {pipeline_mode = #tpu.pipeline_mode<synchronous>, transform_indices = @transform_8, window_bounds = array<i64: 1, 32>}, {pipeline_mode = #tpu.pipeline_mode<synchronous>, transform_indices = @transform_9, window_bounds = array<i64: 32, 64>}, {pipeline_mode = #tpu.pipeline_mode<synchronous>, transform_indices = @transform_10, window_bounds = array<i64: 1, 64>}, {pipeline_mode = #tpu.pipeline_mode<synchronous>, transform_indices = @transform_11, window_bounds = array<i64: 64, 128>}, {pipeline_mode = #tpu.pipeline_mode<synchronous>, transform_indices = @transform_12, window_bounds = array<i64: 1, 128>}, {transform_indices = @transform_13, window_bounds = array<i64: 16, 128>}]} {
    %c0 = arith.constant 0 : index
    %c0_0 = arith.constant 0 : index
    %0 = vector.load %arg1[%c0, %c0_0] : memref<16x128xf32, #tpu.memory_space<vmem>>, vector<16x128xf32>
    %c0_1 = arith.constant 0 : index
    %c0_2 = arith.constant 0 : index
    %1 = vector.load %arg2[%c0_1, %c0_2] : memref<128x64xf32, #tpu.memory_space<vmem>>, vector<128x64xf32>
    %cst = arith.constant dense<0.000000e+00> : vector<16x64xf32>
    %2 = tpu.matmul %0, %1, %cst {dimension_numbers = #tpu.dot_dimension_numbers<[1], [0], [0], [1], [0, 0, 1, 1], [], []>} : vector<16x128xf32>, vector<128x64xf32>, vector<16x64xf32> -> vector<16x64xf32>
    %c0_3 = arith.constant 0 : index
    %c0_4 = arith.constant 0 : index
    %3 = vector.load %arg3[%c0_3, %c0_4] : memref<1x64xf32, #tpu.memory_space<vmem>>, vector<1x64xf32>
    %4 = vector.broadcast %3 : vector<1x64xf32> to vector<16x64xf32>
    %5 = arith.addf %2, %4 : vector<16x64xf32>
    %cst_5 = arith.constant 0.000000e+00 : f32
    %6 = vector.broadcast %cst_5 : f32 to vector<16x64xf32>
    %7 = arith.maximumf %5, %6 : vector<16x64xf32>
    %c0_6 = arith.constant 0 : index
    %c0_7 = arith.constant 0 : index
    %8 = vector.load %arg4[%c0_6, %c0_7] : memref<64x32xf32, #tpu.memory_space<vmem>>, vector<64x32xf32>
    %cst_8 = arith.constant dense<0.000000e+00> : vector<16x32xf32>
    %9 = tpu.matmul %7, %8, %cst_8 {dimension_numbers = #tpu.dot_dimension_numbers<[1], [0], [0], [1], [0, 0, 1, 1], [], []>} : vector<16x64xf32>, vector<64x32xf32>, vector<16x32xf32> -> vector<16x32xf32>
    %c0_9 = arith.constant 0 : index
    %c0_10 = arith.constant 0 : index
    %10 = vector.load %arg5[%c0_9, %c0_10] : memref<1x32xf32, #tpu.memory_space<vmem>>, vector<1x32xf32>
    %11 = vector.broadcast %10 : vector<1x32xf32> to vector<16x32xf32>
    %12 = arith.addf %9, %11 : vector<16x32xf32>
    %cst_11 = arith.constant 0.000000e+00 : f32
    %13 = vector.broadcast %cst_11 : f32 to vector<16x32xf32>
    %14 = arith.maximumf %12, %13 : vector<16x32xf32>
    %c0_12 = arith.constant 0 : index
    %c0_13 = arith.constant 0 : index
    %15 = vector.load %arg6[%c0_12, %c0_13] : memref<32x16xf32, #tpu.memory_space<vmem>>, vector<32x16xf32>
    %cst_14 = arith.constant dense<0.000000e+00> : vector<16x16xf32>
    %16 = tpu.matmul %14, %15, %cst_14 {dimension_numbers = #tpu.dot_dimension_numbers<[1], [0], [0], [1], [0, 0, 1, 1], [], []>} : vector<16x32xf32>, vector<32x16xf32>, vector<16x16xf32> -> vector<16x16xf32>
    %c0_15 = arith.constant 0 : index
    %c0_16 = arith.constant 0 : index
    %17 = vector.load %arg7[%c0_15, %c0_16] : memref<1x16xf32, #tpu.memory_space<vmem>>, vector<1x16xf32>
    %18 = vector.broadcast %17 : vector<1x16xf32> to vector<16x16xf32>
    %19 = arith.addf %16, %18 : vector<16x16xf32>
    %c0_17 = arith.constant 0 : index
    %c0_18 = arith.constant 0 : index
    %20 = vector.load %arg8[%c0_17, %c0_18] : memref<16x32xf32, #tpu.memory_space<vmem>>, vector<16x32xf32>
    %cst_19 = arith.constant dense<0.000000e+00> : vector<16x32xf32>
    %21 = tpu.matmul %19, %20, %cst_19 {dimension_numbers = #tpu.dot_dimension_numbers<[1], [0], [0], [1], [0, 0, 1, 1], [], []>} : vector<16x16xf32>, vector<16x32xf32>, vector<16x32xf32> -> vector<16x32xf32>
    %c0_20 = arith.constant 0 : index
    %c0_21 = arith.constant 0 : index
    %22 = vector.load %arg9[%c0_20, %c0_21] : memref<1x32xf32, #tpu.memory_space<vmem>>, vector<1x32xf32>
    %23 = vector.broadcast %22 : vector<1x32xf32> to vector<16x32xf32>
    %24 = arith.addf %21, %23 : vector<16x32xf32>
    %cst_22 = arith.constant 0.000000e+00 : f32
    %25 = vector.broadcast %cst_22 : f32 to vector<16x32xf32>
    %26 = arith.maximumf %24, %25 : vector<16x32xf32>
    %c0_23 = arith.constant 0 : index
    %c0_24 = arith.constant 0 : index
    %27 = vector.load %arg10[%c0_23, %c0_24] : memref<32x64xf32, #tpu.memory_space<vmem>>, vector<32x64xf32>
    %cst_25 = arith.constant dense<0.000000e+00> : vector<16x64xf32>
    %28 = tpu.matmul %26, %27, %cst_25 {dimension_numbers = #tpu.dot_dimension_numbers<[1], [0], [0], [1], [0, 0, 1, 1], [], []>} : vector<16x32xf32>, vector<32x64xf32>, vector<16x64xf32> -> vector<16x64xf32>
    %c0_26 = arith.constant 0 : index
    %c0_27 = arith.constant 0 : index
    %29 = vector.load %arg11[%c0_26, %c0_27] : memref<1x64xf32, #tpu.memory_space<vmem>>, vector<1x64xf32>
    %30 = vector.broadcast %29 : vector<1x64xf32> to vector<16x64xf32>
    %31 = arith.addf %28, %30 : vector<16x64xf32>
    %cst_28 = arith.constant 0.000000e+00 : f32
    %32 = vector.broadcast %cst_28 : f32 to vector<16x64xf32>
    %33 = arith.maximumf %31, %32 : vector<16x64xf32>
    %c0_29 = arith.constant 0 : index
    %c0_30 = arith.constant 0 : index
    %34 = vector.load %arg12[%c0_29, %c0_30] : memref<64x128xf32, #tpu.memory_space<vmem>>, vector<64x128xf32>
    %cst_31 = arith.constant dense<0.000000e+00> : vector<16x128xf32>
    %35 = tpu.matmul %33, %34, %cst_31 {dimension_numbers = #tpu.dot_dimension_numbers<[1], [0], [0], [1], [0, 0, 1, 1], [], []>} : vector<16x64xf32>, vector<64x128xf32>, vector<16x128xf32> -> vector<16x128xf32>
    %c0_32 = arith.constant 0 : index
    %c0_33 = arith.constant 0 : index
    %36 = vector.load %arg13[%c0_32, %c0_33] : memref<1x128xf32, #tpu.memory_space<vmem>>, vector<1x128xf32>
    %37 = vector.broadcast %36 : vector<1x128xf32> to vector<16x128xf32>
    %38 = arith.addf %35, %37 : vector<16x128xf32>
    %cst_34 = arith.constant 0.000000e+00 : f32
    %39 = vector.broadcast %cst_34 : f32 to vector<16x128xf32>
    %40 = arith.subf %39, %38 : vector<16x128xf32>
    %41 = math.exp %40 : vector<16x128xf32>
    %cst_35 = arith.constant 1.000000e+00 : f32
    %42 = vector.broadcast %cst_35 : f32 to vector<16x128xf32>
    %43 = arith.addf %42, %41 : vector<16x128xf32>
    %44 = tpu.reciprocal %43 {approx = true} : vector<16x128xf32> -> vector<16x128xf32>
    %c0_36 = arith.constant 0 : index
    %c0_37 = arith.constant 0 : index
    %45 = vector.load %arg14[%c0_36, %c0_37] : memref<16x128xf32, #tpu.memory_space<vmem>>, vector<16x128xf32>
    tpu.vector_store %arg14[%c0_36, %c0_37], %44 {strides = array<i32>} : memref<16x128xf32, #tpu.memory_space<vmem>>, vector<16x128xf32>,
    return
  }
  func.func @transform_0(%arg0: i32) -> (i32, i32) {
    %c0_i32 = arith.constant 0 : i32
    %c0_i32_0 = arith.constant 0 : i32
    return %arg0, %c0_i32 : i32, i32
  }
  func.func @transform_1(%arg0: i32) -> (i32, i32) {
    %c0_i32 = arith.constant 0 : i32
    %c0_i32_0 = arith.constant 0 : i32
    %c0_i32_1 = arith.constant 0 : i32
    return %c0_i32, %c0_i32_0 : i32, i32
  }
  func.func @transform_2(%arg0: i32) -> (i32, i32) {
    %c0_i32 = arith.constant 0 : i32
    %c0_i32_0 = arith.constant 0 : i32
    %c0_i32_1 = arith.constant 0 : i32
    return %c0_i32, %c0_i32_0 : i32, i32
  }
  func.func @transform_3(%arg0: i32) -> (i32, i32) {
    %c0_i32 = arith.constant 0 : i32
    %c0_i32_0 = arith.constant 0 : i32
    %c0_i32_1 = arith.constant 0 : i32
    return %c0_i32, %c0_i32_0 : i32, i32
  }
  func.func @transform_4(%arg0: i32) -> (i32, i32) {
    %c0_i32 = arith.constant 0 : i32
    %c0_i32_0 = arith.constant 0 : i32
    %c0_i32_1 = arith.constant 0 : i32
    return %c0_i32, %c0_i32_0 : i32, i32
  }
  func.func @transform_5(%arg0: i32) -> (i32, i32) {
    %c0_i32 = arith.constant 0 : i32
    %c0_i32_0 = arith.constant 0 : i32
    %c0_i32_1 = arith.constant 0 : i32
    return %c0_i32, %c0_i32_0 : i32, i32
  }
  func.func @transform_6(%arg0: i32) -> (i32, i32) {
    %c0_i32 = arith.constant 0 : i32
    %c0_i32_0 = arith.constant 0 : i32
    %c0_i32_1 = arith.constant 0 : i32
    return %c0_i32, %c0_i32_0 : i32, i32
  }
  func.func @transform_7(%arg0: i32) -> (i32, i32) {
    %c0_i32 = arith.constant 0 : i32
    %c0_i32_0 = arith.constant 0 : i32
    %c0_i32_1 = arith.constant 0 : i32
    return %c0_i32, %c0_i32_0 : i32, i32
  }
  func.func @transform_8(%arg0: i32) -> (i32, i32) {
    %c0_i32 = arith.constant 0 : i32
    %c0_i32_0 = arith.constant 0 : i32
    %c0_i32_1 = arith.constant 0 : i32
    return %c0_i32, %c0_i32_0 : i32, i32
  }
  func.func @transform_9(%arg0: i32) -> (i32, i32) {
    %c0_i32 = arith.constant 0 : i32
    %c0_i32_0 = arith.constant 0 : i32
    %c0_i32_1 = arith.constant 0 : i32
    return %c0_i32, %c0_i32_0 : i32, i32
  }
  func.func @transform_10(%arg0: i32) -> (i32, i32) {
    %c0_i32 = arith.constant 0 : i32
    %c0_i32_0 = arith.constant 0 : i32
    %c0_i32_1 = arith.constant 0 : i32
    return %c0_i32, %c0_i32_0 : i32, i32
  }
  func.func @transform_11(%arg0: i32) -> (i32, i32) {
    %c0_i32 = arith.constant 0 : i32
    %c0_i32_0 = arith.constant 0 : i32
    %c0_i32_1 = arith.constant 0 : i32
    return %c0_i32, %c0_i32_0 : i32, i32
  }
  func.func @transform_12(%arg0: i32) -> (i32, i32) {
    %c0_i32 = arith.constant 0 : i32
    %c0_i32_0 = arith.constant 0 : i32
    %c0_i32_1 = arith.constant 0 : i32
    return %c0_i32, %c0_i32_0 : i32, i32
  }
  func.func @transform_13(%arg0: i32) -> (i32, i32) {
    %c0_i32 = arith.constant 0 : i32
    %c0_i32_0 = arith.constant 0 : i32
    return %arg0, %c0_i32 : i32, i32
  }
}

</mosaic_0001>

<llo_original>
// kernel: autoencoder_forward.1
$region0: #{autoencoder_forward.1}
  #allocation0 [shape = 'u32[]', space=smem, size = 0x4, offset = 0x4, fixed_abs, tag = 'smem constant byte address 0x4 - core index']
  #allocation1 [shape = 'u32[144,128]{1,0:T(1,128)}', space=vmem, size = 0x12000, scoped, tag = 'internal scratch']
  %s0 = inlined_call_operand.vmem [shape: f32[32,128], index: 0, kind: input, shape index: {}]
  %s1 = inlined_call_operand.vmem [shape: f32[128,64], index: 1, kind: input, shape index: {}]
  %s2 = inlined_call_operand.vmem [shape: f32[1,64], index: 2, kind: input, shape index: {}]
  %s3 = inlined_call_operand.vmem [shape: f32[64,32], index: 3, kind: input, shape index: {}]
  %s4 = inlined_call_operand.vmem [shape: f32[1,32], index: 4, kind: input, shape index: {}]
  %s5 = inlined_call_operand.vmem [shape: f32[32,16], index: 5, kind: input, shape index: {}]
  %s6 = inlined_call_operand.vmem [shape: f32[1,16], index: 6, kind: input, shape index: {}]
  %s7 = inlined_call_operand.vmem [shape: f32[16,32], index: 7, kind: input, shape index: {}]
  %s8 = inlined_call_operand.vmem [shape: f32[1,32], index: 8, kind: input, shape index: {}]
  %s9 = inlined_call_operand.vmem [shape: f32[32,64], index: 9, kind: input, shape index: {}]
  %s10 = inlined_call_operand.vmem [shape: f32[1,64], index: 10, kind: input, shape index: {}]
  %s11 = inlined_call_operand.vmem [shape: f32[64,128], index: 11, kind: input, shape index: {}]
  %s12 = inlined_call_operand.vmem [shape: f32[1,128], index: 12, kind: input, shape index: {}]
  %s13 = inlined_call_operand.vmem [shape: f32[32,128], index: 13, kind: output, shape index: {}]
  %s14 = sld [smem:[#allocation0]]
  $region85: #{autoencoder_forward.1} parent=0
    _
  %s16 = ssub.s32 1, %s14
  %s17 = scalar_select 0, %s16, %s14
  loop: start=0, step=1, limit=4
  $region2: #{autoencoder_forward.1} parent=0 // loop_pre_header
    _
  $region3: #{autoencoder_forward.1} parent=0 // loop_header
    %s19 = sphi 0, %s23
    %p20 = scmp.ge.s32.totalorder %s19, 4
    %s29 = sphi 0, %s31
    %s32 = sphi 0, %s29
    %s33 = sphi 0, %s32
    %s49 = sphi 0, %s33
    %s53 = sphi 0, %s53
    %s55 = sphi 0, %s53
    %s56 = sphi 0, %s55
    %s70 = sphi 0, %s56
    %s74 = sphi 0, %s74
    %s76 = sphi 0, %s74
    %s77 = sphi 0, %s76
    %s91 = sphi 0, %s77
    %s95 = sphi 0, %s95
    %s97 = sphi 0, %s95
    %s98 = sphi 0, %s97
    %s112 = sphi 0, %s98
    %s116 = sphi 0, %s116
    %s118 = sphi 0, %s116
    %s119 = sphi 0, %s118
    %s133 = sphi 0, %s119
    %s137 = sphi 0, %s137
    %s139 = sphi 0, %s137
    %s140 = sphi 0, %s139
    %s154 = sphi 0, %s140
    %s158 = sphi 0, %s158
    %s160 = sphi 0, %s158
    %s161 = sphi 0, %s160
    %s175 = sphi 0, %s161
    %s179 = sphi 0, %s179
    %s181 = sphi 0, %s179
    %s182 = sphi 0, %s181
    %s196 = sphi 0, %s182
    %s200 = sphi 0, %s200
    %s202 = sphi 0, %s200
    %s203 = sphi 0, %s202
    %s217 = sphi 0, %s203
    %s221 = sphi 0, %s221
    %s223 = sphi 0, %s221
    %s224 = sphi 0, %s223
    %s238 = sphi 0, %s224
    %s242 = sphi 0, %s242
    %s244 = sphi 0, %s242
    %s245 = sphi 0, %s244
    %s259 = sphi 0, %s245
    %s263 = sphi 0, %s263
    %s265 = sphi 0, %s263
    %s266 = sphi 0, %s265
    %s280 = sphi 0, %s266
    %s284 = sphi 0, %s284
    %s286 = sphi 0, %s284
    %s287 = sphi 0, %s286
    %s301 = sphi 0, %s287
    %s307 = sphi 0, %s309
    %s310 = sphi 0, %s307
    %s311 = sphi 0, %s310
    %s327 = sphi 0, %s311
  $region4: #{autoencoder_forward.1} parent=0 // loop_header_branch
    %22 = sbr.rel (%p20) target = $region8
  $region5: #{autoencoder_forward.1} parent=0 // loop_body
    %s24 = ssub.s32 %s19, 1
    %s25 = ssub.s32 %s19, 2
    %s26 = sadd.s32 %s19, 1
    %s27 = ssub.s32 %s19, %s26
    %p28 = scmp.eq.s32.totalorder %s27, 0
    %s30 = sadd.s32 %s29, 1
    %s31 = scalar_select %p28, %s29, %s30
    %p34 = pneg %p28
    %p35 = scmp.eq.s32.totalorder %s19, 1
    %p36 = por %p34, %p35
    %p37 = scmp.ne.s32.totalorder %s29, %s32
    %p38 = scmp.eq.s32.totalorder %s19, 0
    %p39 = por %p37, %p38
    %p40 = scmp.ne.s32.totalorder %s29, %s32
    %p41 = scmp.eq.s32.totalorder %s24, 1
    %p42 = por %p40, %p41
    %p43 = scmp.ne.s32.totalorder %s32, %s33
    %p44 = scmp.eq.s32.totalorder %s24, 0
    %p45 = por %p43, %p44
    %p46 = scmp.ne.s32.totalorder %s32, %s33
    %p47 = scmp.eq.s32.totalorder %s25, 1
    %p48 = por %p46, %p47
    %p50 = scmp.ne.s32.totalorder %s33, %s49
    %p51 = scmp.eq.s32.totalorder %s25, 0
    %p52 = por %p50, %p51
    %s54 = sadd.s32 %s53, 1
    %p57 = scmp.eq.s32.totalorder %s19, 1
    %p58 = scmp.ne.s32.totalorder %s53, %s55
    %p59 = scmp.eq.s32.totalorder %s19, 0
    %p60 = por %p58, %p59
    %p61 = scmp.ne.s32.totalorder %s53, %s55
    %p62 = scmp.eq.s32.totalorder %s24, 1
    %p63 = por %p61, %p62
    %p64 = scmp.ne.s32.totalorder %s55, %s56
    %p65 = scmp.eq.s32.totalorder %s24, 0
    %p66 = por %p64, %p65
    %p67 = scmp.ne.s32.totalorder %s55, %s56
    %p68 = scmp.eq.s32.totalorder %s25, 1
    %p69 = por %p67, %p68
    %p71 = scmp.ne.s32.totalorder %s56, %s70
    %p72 = scmp.eq.s32.totalorder %s25, 0
    %p73 = por %p71, %p72
    %s75 = sadd.s32 %s74, 1
    %p78 = scmp.eq.s32.totalorder %s19, 1
    %p79 = scmp.ne.s32.totalorder %s74, %s76
    %p80 = scmp.eq.s32.totalorder %s19, 0
    %p81 = por %p79, %p80
    %p82 = scmp.ne.s32.totalorder %s74, %s76
    %p83 = scmp.eq.s32.totalorder %s24, 1
    %p84 = por %p82, %p83
    %p85 = scmp.ne.s32.totalorder %s76, %s77
    %p86 = scmp.eq.s32.totalorder %s24, 0
    %p87 = por %p85, %p86
    %p88 = scmp.ne.s32.totalorder %s76, %s77
    %p89 = scmp.eq.s32.totalorder %s25, 1
    %p90 = por %p88, %p89
    %p92 = scmp.ne.s32.totalorder %s77, %s91
    %p93 = scmp.eq.s32.totalorder %s25, 0
    %p94 = por %p92, %p93
    %s96 = sadd.s32 %s95, 1
    %p99 = scmp.eq.s32.totalorder %s19, 1
    %p100 = scmp.ne.s32.totalorder %s95, %s97
    %p101 = scmp.eq.s32.totalorder %s19, 0
    %p102 = por %p100, %p101
    %p103 = scmp.ne.s32.totalorder %s95, %s97
    %p104 = scmp.eq.s32.totalorder %s24, 1
    %p105 = por %p103, %p104
    %p106 = scmp.ne.s32.totalorder %s97, %s98
    %p107 = scmp.eq.s32.totalorder %s24, 0
    %p108 = por %p106, %p107
    %p109 = scmp.ne.s32.totalorder %s97, %s98
    %p110 = scmp.eq.s32.totalorder %s25, 1
    %p111 = por %p109, %p110
    %p113 = scmp.ne.s32.totalorder %s98, %s112
    %p114 = scmp.eq.s32.totalorder %s25, 0
    %p115 = por %p113, %p114
    %s117 = sadd.s32 %s116, 1
    %p120 = scmp.eq.s32.totalorder %s19, 1
    %p121 = scmp.ne.s32.totalorder %s116, %s118
    %p122 = scmp.eq.s32.totalorder %s19, 0
    %p123 = por %p121, %p122
    %p124 = scmp.ne.s32.totalorder %s116, %s118
    %p125 = scmp.eq.s32.totalorder %s24, 1
    %p126 = por %p124, %p125
    %p127 = scmp.ne.s32.totalorder %s118, %s119
    %p128 = scmp.eq.s32.totalorder %s24, 0
    %p129 = por %p127, %p128
    %p130 = scmp.ne.s32.totalorder %s118, %s119
    %p131 = scmp.eq.s32.totalorder %s25, 1
    %p132 = por %p130, %p131
    %p134 = scmp.ne.s32.totalorder %s119, %s133
    %p135 = scmp.eq.s32.totalorder %s25, 0
    %p136 = por %p134, %p135
    %s138 = sadd.s32 %s137, 1
    %p141 = scmp.eq.s32.totalorder %s19, 1
    %p142 = scmp.ne.s32.totalorder %s137, %s139
    %p143 = scmp.eq.s32.totalorder %s19, 0
    %p144 = por %p142, %p143
    %p145 = scmp.ne.s32.totalorder %s137, %s139
    %p146 = scmp.eq.s32.totalorder %s24, 1
    %p147 = por %p145, %p146
    %p148 = scmp.ne.s32.totalorder %s139, %s140
    %p149 = scmp.eq.s32.totalorder %s24, 0
    %p150 = por %p148, %p149
    %p151 = scmp.ne.s32.totalorder %s139, %s140
    %p152 = scmp.eq.s32.totalorder %s25, 1
    %p153 = por %p151, %p152
    %p155 = scmp.ne.s32.totalorder %s140, %s154
    %p156 = scmp.eq.s32.totalorder %s25, 0
    %p157 = por %p155, %p156
    %s159 = sadd.s32 %s158, 1
    %p162 = scmp.eq.s32.totalorder %s19, 1
    %p163 = scmp.ne.s32.totalorder %s158, %s160
    %p164 = scmp.eq.s32.totalorder %s19, 0
    %p165 = por %p163, %p164
    %p166 = scmp.ne.s32.totalorder %s158, %s160
    %p167 = scmp.eq.s32.totalorder %s24, 1
    %p168 = por %p166, %p167
    %p169 = scmp.ne.s32.totalorder %s160, %s161
    %p170 = scmp.eq.s32.totalorder %s24, 0
    %p171 = por %p169, %p170
    %p172 = scmp.ne.s32.totalorder %s160, %s161
    %p173 = scmp.eq.s32.totalorder %s25, 1
    %p174 = por %p172, %p173
    %p176 = scmp.ne.s32.totalorder %s161, %s175
    %p177 = scmp.eq.s32.totalorder %s25, 0
    %p178 = por %p176, %p177
    %s180 = sadd.s32 %s179, 1
    %p183 = scmp.eq.s32.totalorder %s19, 1
    %p184 = scmp.ne.s32.totalorder %s179, %s181
    %p185 = scmp.eq.s32.totalorder %s19, 0
    %p186 = por %p184, %p185
    %p187 = scmp.ne.s32.totalorder %s179, %s181
    %p188 = scmp.eq.s32.totalorder %s24, 1
    %p189 = por %p187, %p188
    %p190 = scmp.ne.s32.totalorder %s181, %s182
    %p191 = scmp.eq.s32.totalorder %s24, 0
    %p192 = por %p190, %p191
    %p193 = scmp.ne.s32.totalorder %s181, %s182
    %p194 = scmp.eq.s32.totalorder %s25, 1
    %p195 = por %p193, %p194
    %p197 = scmp.ne.s32.totalorder %s182, %s196
    %p198 = scmp.eq.s32.totalorder %s25, 0
    %p199 = por %p197, %p198
    %s201 = sadd.s32 %s200, 1
    %p204 = scmp.eq.s32.totalorder %s19, 1
    %p205 = scmp.ne.s32.totalorder %s200, %s202
    %p206 = scmp.eq.s32.totalorder %s19, 0
    %p207 = por %p205, %p206
    %p208 = scmp.ne.s32.totalorder %s200, %s202
    %p209 = scmp.eq.s32.totalorder %s24, 1
    %p210 = por %p208, %p209
    %p211 = scmp.ne.s32.totalorder %s202, %s203
    %p212 = scmp.eq.s32.totalorder %s24, 0
    %p213 = por %p211, %p212
    %p214 = scmp.ne.s32.totalorder %s202, %s203
    %p215 = scmp.eq.s32.totalorder %s25, 1
    %p216 = por %p214, %p215
    %p218 = scmp.ne.s32.totalorder %s203, %s217
    %p219 = scmp.eq.s32.totalorder %s25, 0
    %p220 = por %p218, %p219
    %s222 = sadd.s32 %s221, 1
    %p225 = scmp.eq.s32.totalorder %s19, 1
    %p226 = scmp.ne.s32.totalorder %s221, %s223
    %p227 = scmp.eq.s32.totalorder %s19, 0
    %p228 = por %p226, %p227
    %p229 = scmp.ne.s32.totalorder %s221, %s223
    %p230 = scmp.eq.s32.totalorder %s24, 1
    %p231 = por %p229, %p230
    %p232 = scmp.ne.s32.totalorder %s223, %s224
    %p233 = scmp.eq.s32.totalorder %s24, 0
    %p234 = por %p232, %p233
    %p235 = scmp.ne.s32.totalorder %s223, %s224
    %p236 = scmp.eq.s32.totalorder %s25, 1
    %p237 = por %p235, %p236
    %p239 = scmp.ne.s32.totalorder %s224, %s238
    %p240 = scmp.eq.s32.totalorder %s25, 0
    %p241 = por %p239, %p240
    %s243 = sadd.s32 %s242, 1
    %p246 = scmp.eq.s32.totalorder %s19, 1
    %p247 = scmp.ne.s32.totalorder %s242, %s244
    %p248 = scmp.eq.s32.totalorder %s19, 0
    %p249 = por %p247, %p248
    %p250 = scmp.ne.s32.totalorder %s242, %s244
    %p251 = scmp.eq.s32.totalorder %s24, 1
    %p252 = por %p250, %p251
    %p253 = scmp.ne.s32.totalorder %s244, %s245
    %p254 = scmp.eq.s32.totalorder %s24, 0
    %p255 = por %p253, %p254
    %p256 = scmp.ne.s32.totalorder %s244, %s245
    %p257 = scmp.eq.s32.totalorder %s25, 1
    %p258 = por %p256, %p257
    %p260 = scmp.ne.s32.totalorder %s245, %s259
    %p261 = scmp.eq.s32.totalorder %s25, 0
    %p262 = por %p260, %p261
    %s264 = sadd.s32 %s263, 1
    %p267 = scmp.eq.s32.totalorder %s19, 1
    %p268 = scmp.ne.s32.totalorder %s263, %s265
    %p269 = scmp.eq.s32.totalorder %s19, 0
    %p270 = por %p268, %p269
    %p271 = scmp.ne.s32.totalorder %s263, %s265
    %p272 = scmp.eq.s32.totalorder %s24, 1
    %p273 = por %p271, %p272
    %p274 = scmp.ne.s32.totalorder %s265, %s266
    %p275 = scmp.eq.s32.totalorder %s24, 0
    %p276 = por %p274, %p275
    %p277 = scmp.ne.s32.totalorder %s265, %s266
    %p278 = scmp.eq.s32.totalorder %s25, 1
    %p279 = por %p277, %p278
    %p281 = scmp.ne.s32.totalorder %s266, %s280
    %p282 = scmp.eq.s32.totalorder %s25, 0
    %p283 = por %p281, %p282
    %s285 = sadd.s32 %s284, 1
    %p288 = scmp.eq.s32.totalorder %s19, 1
    %p289 = scmp.ne.s32.totalorder %s284, %s286
    %p290 = scmp.eq.s32.totalorder %s19, 0
    %p291 = por %p289, %p290
    %p292 = scmp.ne.s32.totalorder %s284, %s286
    %p293 = scmp.eq.s32.totalorder %s24, 1
    %p294 = por %p292, %p293
    %p295 = scmp.ne.s32.totalorder %s286, %s287
    %p296 = scmp.eq.s32.totalorder %s24, 0
    %p297 = por %p295, %p296
    %p298 = scmp.ne.s32.totalorder %s286, %s287
    %p299 = scmp.eq.s32.totalorder %s25, 1
    %p300 = por %p298, %p299
    %p302 = scmp.ne.s32.totalorder %s287, %s301
    %p303 = scmp.eq.s32.totalorder %s25, 0
    %p304 = por %p302, %p303
    %s305 = ssub.s32 %s19, %s26
    %p306 = scmp.eq.s32.totalorder %s305, 0
    %s308 = sadd.s32 %s307, 1
    %s309 = scalar_select %p306, %s307, %s308
    %p312 = pneg %p306
    %p313 = scmp.eq.s32.totalorder %s19, 1
    %p314 = por %p312, %p313
    %p315 = scmp.ne.s32.totalorder %s307, %s310
    %p316 = scmp.eq.s32.totalorder %s19, 0
    %p317 = por %p315, %p316
    %p318 = scmp.ne.s32.totalorder %s307, %s310
    %p319 = scmp.eq.s32.totalorder %s24, 1
    %p320 = por %p318, %p319
    %p321 = scmp.ne.s32.totalorder %s310, %s311
    %p322 = scmp.eq.s32.totalorder %s24, 0
    %p323 = por %p321, %p322
    %p324 = scmp.ne.s32.totalorder %s310, %s311
    %p325 = scmp.eq.s32.totalorder %s25, 1
    %p326 = por %p324, %p325
    %p328 = scmp.ne.s32.totalorder %s311, %s327
    %p329 = scmp.eq.s32.totalorder %s25, 0
    %p330 = por %p328, %p329
    %p331 = scmp.le.s32.totalorder 1, %s19
    %p332 = scmp.lt.s32.totalorder %s19, 3
    %p333 = pnand %p331, %p332
    %p334 = pneg %p333
    // Predicated region
    $region9: #{autoencoder_forward.1} parent=5 // pred_check
      _
    $region10: #{autoencoder_forward.1} parent=5 // pred_check_branch
      %336 = sbr.rel (%p333) target = $region12
    $region11: #{autoencoder_forward.1} parent=5 // pred_region
      %s337 = ssub.s32 %s19, 1
      // Predicated region
      $region13: #{autoencoder_forward.1} parent=11 // pred_check
        %p338 = pneg %p66
      $region14: #{autoencoder_forward.1} parent=11 // pred_check_branch
        %340 = sbr.rel (%p338) target = $region16
      $region15: #{autoencoder_forward.1} parent=11 // pred_region
        _
      $region16: #{autoencoder_forward.1} parent=11 // pred_fallthru
        _
      // Predicated region
      $region17: #{autoencoder_forward.1} parent=11 // pred_check
        %p341 = pneg %p87
      $region18: #{autoencoder_forward.1} parent=11 // pred_check_branch
        %343 = sbr.rel (%p341) target = $region20
      $region19: #{autoencoder_forward.1} parent=11 // pred_region
        _
      $region20: #{autoencoder_forward.1} parent=11 // pred_fallthru
        _
      // Predicated region
      $region21: #{autoencoder_forward.1} parent=11 // pred_check
        %p344 = pneg %p108
      $region22: #{autoencoder_forward.1} parent=11 // pred_check_branch
        %346 = sbr.rel (%p344) target = $region24
      $region23: #{autoencoder_forward.1} parent=11 // pred_region
        _
      $region24: #{autoencoder_forward.1} parent=11 // pred_fallthru
        _
      // Predicated region
      $region25: #{autoencoder_forward.1} parent=11 // pred_check
        %p347 = pneg %p129
      $region26: #{autoencoder_forward.1} parent=11 // pred_check_branch
        %349 = sbr.rel (%p347) target = $region28
      $region27: #{autoencoder_forward.1} parent=11 // pred_region
        _
      $region28: #{autoencoder_forward.1} parent=11 // pred_fallthru
        _
      // Predicated region
      $region29: #{autoencoder_forward.1} parent=11 // pred_check
        %p350 = pneg %p150
      $region30: #{autoencoder_forward.1} parent=11 // pred_check_branch
        %352 = sbr.rel (%p350) target = $region32
      $region31: #{autoencoder_forward.1} parent=11 // pred_region
        _
      $region32: #{autoencoder_forward.1} parent=11 // pred_fallthru
        _
      // Predicated region
      $region33: #{autoencoder_forward.1} parent=11 // pred_check
        %p353 = pneg %p171
      $region34: #{autoencoder_forward.1} parent=11 // pred_check_branch
        %355 = sbr.rel (%p353) target = $region36
      $region35: #{autoencoder_forward.1} parent=11 // pred_region
        _
      $region36: #{autoencoder_forward.1} parent=11 // pred_fallthru
        _
      // Predicated region
      $region37: #{autoencoder_forward.1} parent=11 // pred_check
        %p356 = pneg %p192
      $region38: #{autoencoder_forward.1} parent=11 // pred_check_branch
        %358 = sbr.rel (%p356) target = $region40
      $region39: #{autoencoder_forward.1} parent=11 // pred_region
        _
      $region40: #{autoencoder_forward.1} parent=11 // pred_fallthru
        _
      // Predicated region
      $region41: #{autoencoder_forward.1} parent=11 // pred_check
        %p359 = pneg %p213
      $region42: #{autoencoder_forward.1} parent=11 // pred_check_branch
        %361 = sbr.rel (%p359) target = $region44
      $region43: #{autoencoder_forward.1} parent=11 // pred_region
        _
      $region44: #{autoencoder_forward.1} parent=11 // pred_fallthru
        _
      // Predicated region
      $region45: #{autoencoder_forward.1} parent=11 // pred_check
        %p362 = pneg %p234
      $region46: #{autoencoder_forward.1} parent=11 // pred_check_branch
        %364 = sbr.rel (%p362) target = $region48
      $region47: #{autoencoder_forward.1} parent=11 // pred_region
        _
      $region48: #{autoencoder_forward.1} parent=11 // pred_fallthru
        _
      // Predicated region
      $region49: #{autoencoder_forward.1} parent=11 // pred_check
        %p365 = pneg %p255
      $region50: #{autoencoder_forward.1} parent=11 // pred_check_branch
        %367 = sbr.rel (%p365) target = $region52
      $region51: #{autoencoder_forward.1} parent=11 // pred_region
        _
      $region52: #{autoencoder_forward.1} parent=11 // pred_fallthru
        _
      // Predicated region
      $region53: #{autoencoder_forward.1} parent=11 // pred_check
        %p368 = pneg %p276
      $region54: #{autoencoder_forward.1} parent=11 // pred_check_branch
        %370 = sbr.rel (%p368) target = $region56
      $region55: #{autoencoder_forward.1} parent=11 // pred_region
        _
      $region56: #{autoencoder_forward.1} parent=11 // pred_fallthru
        _
      // Predicated region
      $region57: #{autoencoder_forward.1} parent=11 // pred_check
        %p371 = pneg %p297
      $region58: #{autoencoder_forward.1} parent=11 // pred_check_branch
        %373 = sbr.rel (%p371) target = $region60
      $region59: #{autoencoder_forward.1} parent=11 // pred_region
        _
      $region60: #{autoencoder_forward.1} parent=11 // pred_fallthru
        _
    $region12: #{autoencoder_forward.1} parent=5 // pred_fallthru
      _
    %p374 = scmp.lt.s32.totalorder %s19, 2
    // Predicated region
    $region61: #{autoencoder_forward.1} parent=5 // pred_check
      %p375 = pneg %p374
    $region62: #{autoencoder_forward.1} parent=5 // pred_check_branch
      %377 = sbr.rel (%p375) target = $region64
    $region63: #{autoencoder_forward.1} parent=5 // pred_region
      // Predicated region
      $region65: #{autoencoder_forward.1} parent=63 // pred_check
        %p378 = pneg %p39
      $region66: #{autoencoder_forward.1} parent=63 // pred_check_branch
        %380 = sbr.rel (%p378) target = $region68
      $region67: #{autoencoder_forward.1} parent=63 // pred_region
        %s381 = smul.u32 2, %s19
        %p382 = scmp.lt.s32.totalorder %s381, 3
        %s383 = scalar_select %p382, %s381, 3
        %s384 = smul.addr %s383, 8
        %s385 = scalar_lea.vmem %s0, %s384
        %s386 = smul.u32 2, %s19
      $region68: #{autoencoder_forward.1} parent=63 // pred_fallthru
        _
    $region64: #{autoencoder_forward.1} parent=5 // pred_fallthru
      _
    %p387 = scmp.le.s32.totalorder 1, %s19
    %p388 = scmp.lt.s32.totalorder %s19, 3
    %p389 = pnand %p387, %p388
    %p390 = pneg %p389
    // Predicated region
    $region69: #{autoencoder_forward.1} parent=5 // pred_check
      _
    $region70: #{autoencoder_forward.1} parent=5 // pred_check_branch
      %392 = sbr.rel (%p389) target = $region72
    $region71: #{autoencoder_forward.1} parent=5 // pred_region
      %s393 = ssub.s32 %s19, 1
      %s394 = smul.u32 2, %s24
      %p395 = scmp.lt.s32.totalorder %s394, 3
      %s396 = scalar_select %p395, %s394, 3
      %s397 = smul.addr %s396, 8
      %s398 = scalar_lea.vmem %s0, %s397
      %p399 = pneg %p45
      %p400 = pneg %p42
      %p401 = pneg %p66
      %p402 = pneg %p63
      %p403 = pneg %p87
      %p404 = pneg %p84
      %p405 = pneg %p108
      %p406 = pneg %p105
      %p407 = pneg %p129
      %p408 = pneg %p126
      %p409 = pneg %p150
      %p410 = pneg %p147
      %p411 = pneg %p171
      %p412 = pneg %p168
      %p413 = pneg %p192
      %p414 = pneg %p189
      %p415 = pneg %p213
      %p416 = pneg %p210
      %p417 = pneg %p234
      %p418 = pneg %p231
      %p419 = pneg %p255
      %p420 = pneg %p252
      %p421 = pneg %p276
      %p422 = pneg %p273
      %p423 = pneg %p297
      %p424 = pneg %p294
      %p425 = pneg %p323
      %p426 = pneg %p320
      %s427 = smul.u32 2, %s24
      %p428 = scmp.lt.s32.totalorder %s427, 3
      %s429 = scalar_select %p428, %s427, 3
      %s430 = smul.addr %s429, 8
      %s431 = scalar_lea.vmem %s13, %s430
      %s432 = smul.u32 2, %s24
      %p433 = scmp.lt.s32.totalorder %s432, 3
      %s434 = scalar_select %p433, %s432, 3
      %s435 = smul.addr %s434, 8
      %s436 = scalar_lea.vmem %s0, %s435
      %s437 = smul.u32 2, %s24
      %s438 = smul.u32 2, %s24
      %p439 = scmp.lt.s32.totalorder %s438, 3
      %s440 = scalar_select %p439, %s438, 3
      %s441 = smul.addr %s440, 8
      %s442 = scalar_lea.vmem %s13, %s441
      %s443 = smul.u32 2, %s24
      %v444 = vld [vmem:[%s436] sm:$0xff]
      %v445 = vld [vmem:[%s436 + $0x8] sm:$0xff]
      %v446 = vld [vmem:[%s1] sm:$0xff]
      %v447 = vld [vmem:[%s1 + $0x8] sm:$0xff]
      %v448 = vld [vmem:[%s1 + $0x10] sm:$0xff]
      %v449 = vld [vmem:[%s1 + $0x18] sm:$0xff]
      %v450 = vld [vmem:[%s1 + $0x20] sm:$0xff]
      %v451 = vld [vmem:[%s1 + $0x28] sm:$0xff]
      %v452 = vld [vmem:[%s1 + $0x30] sm:$0xff]
      %v453 = vld [vmem:[%s1 + $0x38] sm:$0xff]
      %v454 = vld [vmem:[%s1 + $0x40] sm:$0xff]
      %v455 = vld [vmem:[%s1 + $0x48] sm:$0xff]
      %v456 = vld [vmem:[%s1 + $0x50] sm:$0xff]
      %v457 = vld [vmem:[%s1 + $0x58] sm:$0xff]
      %v458 = vld [vmem:[%s1 + $0x60] sm:$0xff]
      %v459 = vld [vmem:[%s1 + $0x68] sm:$0xff]
      %v460 = vld [vmem:[%s1 + $0x70] sm:$0xff]
      %v461 = vld [vmem:[%s1 + $0x78] sm:$0xff]
      %v462 = vld [vmem:[%s2] sm:$0x1]
      %v464 = vlaneseq
      %v465 = vshrl.u32 %v464, 7
      %v466 = vsub.s32 0, %v465
      %v467 = vrot.slane %v462, %v466
      %469 = vmatprep.subr.mxu0 0.0
      %470 = vmatpush1.msra.mxu0 %v446
      %471 = vmatprep.subr.mxu0 0.0
      %472 = vmatpush1.msra.mxu0 %v447
      %473 = vmatprep.subr.mxu0 0.0
      %474 = vmatpush1.msra.mxu0 %v448
      %475 = vmatprep.subr.mxu0 0.0
      %476 = vmatpush1.msra.mxu0 %v449
      %477 = vmatprep.subr.mxu0 0.0
      %478 = vmatpush1.msra.mxu0 %v450
      %479 = vmatprep.subr.mxu0 0.0
      %480 = vmatpush1.msra.mxu0 %v451
      %481 = vmatprep.subr.mxu0 0.0
      %482 = vmatpush1.msra.mxu0 %v452
      %483 = vmatprep.subr.mxu0 0.0
      %484 = vmatpush1.msra.mxu0 %v453
      %485 = vmatprep.subr.mxu0 0.0
      %486 = vmatpush1.msra.mxu0 %v454
      %487 = vmatprep.subr.mxu0 0.0
      %488 = vmatpush1.msra.mxu0 %v455
      %489 = vmatprep.subr.mxu0 0.0
      %490 = vmatpush1.msra.mxu0 %v456
      %491 = vmatprep.subr.mxu0 0.0
      %492 = vmatpush1.msra.mxu0 %v457
      %493 = vmatprep.subr.mxu0 0.0
      %494 = vmatpush1.msra.mxu0 %v458
      %495 = vmatprep.subr.mxu0 0.0
      %496 = vmatpush1.msra.mxu0 %v459
      %497 = vmatprep.subr.mxu0 0.0
      %498 = vmatpush1.msra.mxu0 %v460
      %499 = vmatprep.subr.mxu0 0.0
      %500 = vmatpush1.msra.mxu0 %v461
      %501 = vmatprep.subr.mxu0 0.0
      %502 = vmatpush1.msra.mxu0 0.0
      %503 = vmatprep.subr.mxu0 0.0
      %504 = vmatpush1.msra.mxu0 0.0
      %505 = vmatprep.subr.mxu0 0.0
      %506 = vmatpush1.msra.mxu0 0.0
      %507 = vmatprep.subr.mxu0 0.0
      %508 = vmatpush1.msra.mxu0 0.0
      %509 = vmatprep.subr.mxu0 0.0
      %510 = vmatpush1.msra.mxu0 0.0
      %511 = vmatprep.subr.mxu0 0.0
      %512 = vmatpush1.msra.mxu0 0.0
      %513 = vmatprep.subr.mxu0 0.0
      %514 = vmatpush1.msra.mxu0 0.0
      %515 = vmatprep.subr.mxu0 0.0
      %516 = vmatpush1.msra.mxu0 0.0
      %517 = vmatprep.subr.mxu0 0.0
      %518 = vmatpush1.msra.mxu0 0.0
      %519 = vmatprep.subr.mxu0 0.0
      %520 = vmatpush1.msra.mxu0 0.0
      %521 = vmatprep.subr.mxu0 0.0
      %522 = vmatpush1.msra.mxu0 0.0
      %523 = vmatprep.subr.mxu0 0.0
      %524 = vmatpush1.msra.mxu0 0.0
      %525 = vmatprep.subr.mxu0 0.0
      %526 = vmatpush1.msra.mxu0 0.0
      %527 = vmatprep.subr.mxu0 0.0
      %528 = vmatpush1.msra.mxu0 0.0
      %529 = vmatprep.subr.mxu0 0.0
      %530 = vmatpush1.msra.mxu0 0.0
      %531 = vmatprep.subr.mxu0 0.0
      %532 = vmatpush1.msra.mxu0 0.0
      %533 = vmatprep.mubr.f32.mxu0 0.0
      %534 = vmatmul.mubr.f32.gmra.mrb[0].mxu0 %v444
      %v535 = vpop.f32.mrb[0].mxu0
      %v536 = vadd.f32 %v467, %v535
      %v537 = vpop.f32.mrb[0].mxu0
      %538 = vmatprep.mubr.f32.mxu0 0.0
      %539 = vmatmul.mubr.f32.gmra.mrb[0].mxu0 %v445
      %v540 = vpop.f32.mrb[0].mxu0
      %v541 = vadd.f32 %v467, %v540
      %v542 = vpop.f32.mrb[0].mxu0
      %543 = vdwg.mxu0
      %v544 = vmax.f32 %v536, 0.0
      %v545 = vmax.f32 %v541, 0.0
      %v546 = vld [vmem:[%s3] sm:$0xff]
      %v547 = vld [vmem:[%s3 + $0x8] sm:$0xff]
      %v548 = vld [vmem:[%s3 + $0x10] sm:$0xff]
      %v549 = vld [vmem:[%s3 + $0x18] sm:$0xff]
      %v550 = vld [vmem:[%s3 + $0x20] sm:$0xff]
      %v551 = vld [vmem:[%s3 + $0x28] sm:$0xff]
      %v552 = vld [vmem:[%s3 + $0x30] sm:$0xff]
      %v553 = vld [vmem:[%s3 + $0x38] sm:$0xff]
      %v554 = vld [vmem:[%s4] sm:$0x1]
      %v556 = vlaneseq
      %v557 = vshrl.u32 %v556, 7
      %v558 = vsub.s32 0, %v557
      %v559 = vrot.slane %v554, %v558
      %vm561 = vcmask 523264
      %v563 = vsel %vm561, %v544, 0
      %v566 = vsel %vm561, %v545, 0
      %568 = vmatprep.subr.mxu0 0.0
      %569 = vmatpush1.msra.mxu0 %v546
      %570 = vmatprep.subr.mxu0 0.0
      %571 = vmatpush1.msra.mxu0 %v547
      %572 = vmatprep.subr.mxu0 0.0
      %573 = vmatpush1.msra.mxu0 %v548
      %574 = vmatprep.subr.mxu0 0.0
      %575 = vmatpush1.msra.mxu0 %v549
      %576 = vmatprep.subr.mxu0 0.0
      %577 = vmatpush1.msra.mxu0 %v550
      %578 = vmatprep.subr.mxu0 0.0
      %579 = vmatpush1.msra.mxu0 %v551
      %580 = vmatprep.subr.mxu0 0.0
      %581 = vmatpush1.msra.mxu0 %v552
      %582 = vmatprep.subr.mxu0 0.0
      %583 = vmatpush1.msra.mxu0 %v553
      %584 = vmatprep.subr.mxu0 0.0
      %585 = vmatpush1.msra.mxu0 0.0
      %586 = vmatprep.subr.mxu0 0.0
      %587 = vmatpush1.msra.mxu0 0.0
      %588 = vmatprep.subr.mxu0 0.0
      %589 = vmatpush1.msra.mxu0 0.0
      %590 = vmatprep.subr.mxu0 0.0
      %591 = vmatpush1.msra.mxu0 0.0
      %592 = vmatprep.subr.mxu0 0.0
      %593 = vmatpush1.msra.mxu0 0.0
      %594 = vmatprep.subr.mxu0 0.0
      %595 = vmatpush1.msra.mxu0 0.0
      %596 = vmatprep.subr.mxu0 0.0
      %597 = vmatpush1.msra.mxu0 0.0
      %598 = vmatprep.subr.mxu0 0.0
      %599 = vmatpush1.msra.mxu0 0.0
      %600 = vmatprep.subr.mxu0 0.0
      %601 = vmatpush1.msra.mxu0 0.0
      %602 = vmatprep.subr.mxu0 0.0
      %603 = vmatpush1.msra.mxu0 0.0
      %604 = vmatprep.subr.mxu0 0.0
      %605 = vmatpush1.msra.mxu0 0.0
      %606 = vmatprep.subr.mxu0 0.0
      %607 = vmatpush1.msra.mxu0 0.0
      %608 = vmatprep.subr.mxu0 0.0
      %609 = vmatpush1.msra.mxu0 0.0
      %610 = vmatprep.subr.mxu0 0.0
      %611 = vmatpush1.msra.mxu0 0.0
      %612 = vmatprep.subr.mxu0 0.0
      %613 = vmatpush1.msra.mxu0 0.0
      %614 = vmatprep.subr.mxu0 0.0
      %615 = vmatpush1.msra.mxu0 0.0
      %616 = vmatprep.subr.mxu0 0.0
      %617 = vmatpush1.msra.mxu0 0.0
      %618 = vmatprep.subr.mxu0 0.0
      %619 = vmatpush1.msra.mxu0 0.0
      %620 = vmatprep.subr.mxu0 0.0
      %621 = vmatpush1.msra.mxu0 0.0
      %622 = vmatprep.subr.mxu0 0.0
      %623 = vmatpush1.msra.mxu0 0.0
      %624 = vmatprep.subr.mxu0 0.0
      %625 = vmatpush1.msra.mxu0 0.0
      %626 = vmatprep.subr.mxu0 0.0
      %627 = vmatpush1.msra.mxu0 0.0
      %628 = vmatprep.subr.mxu0 0.0
      %629 = vmatpush1.msra.mxu0 0.0
      %630 = vmatprep.subr.mxu0 0.0
      %631 = vmatpush1.msra.mxu0 0.0
      %632 = vmatprep.mubr.f32.mxu0 0.0
      %633 = vmatmul.mubr.f32.gmra.mrb[0].mxu0 %v563
      %v634 = vpop.f32.mrb[0].mxu0
      %v635 = vadd.f32 %v559, %v634
      %v636 = vpop.f32.mrb[0].mxu0
      %637 = vmatprep.mubr.f32.mxu0 0.0
      %638 = vmatmul.mubr.f32.gmra.mrb[0].mxu0 %v566
      %v639 = vpop.f32.mrb[0].mxu0
      %v640 = vadd.f32 %v559, %v639
      %v641 = vpop.f32.mrb[0].mxu0
      %642 = vdwg.mxu0
      %v643 = vmax.f32 %v635, 0.0
      %v644 = vmax.f32 %v640, 0.0
      %v645 = vld [vmem:[%s5] sm:$0xff]
      %v646 = vld [vmem:[%s5 + $0x8] sm:$0xff]
      %v647 = vld [vmem:[%s5 + $0x10] sm:$0xff]
      %v648 = vld [vmem:[%s5 + $0x18] sm:$0xff]
      %v649 = vld [vmem:[%s6] sm:$0x1]
      %v651 = vlaneseq
      %v652 = vshrl.u32 %v651, 7
      %v653 = vsub.s32 0, %v652
      %v654 = vrot.slane %v649, %v653
      %vm656 = vcmask 261120
      %v658 = vsel %vm656, %v643, 0
      %v661 = vsel %vm656, %v644, 0
      %663 = vmatprep.subr.mxu0 0.0
      %664 = vmatpush1.msra.mxu0 %v645
      %665 = vmatprep.subr.mxu0 0.0
      %666 = vmatpush1.msra.mxu0 %v646
      %667 = vmatprep.subr.mxu0 0.0
      %668 = vmatpush1.msra.mxu0 %v647
      %669 = vmatprep.subr.mxu0 0.0
      %670 = vmatpush1.msra.mxu0 %v648
      %671 = vmatprep.subr.mxu0 0.0
      %672 = vmatpush1.msra.mxu0 0.0
      %673 = vmatprep.subr.mxu0 0.0
      %674 = vmatpush1.msra.mxu0 0.0
      %675 = vmatprep.subr.mxu0 0.0
      %676 = vmatpush1.msra.mxu0 0.0
      %677 = vmatprep.subr.mxu0 0.0
      %678 = vmatpush1.msra.mxu0 0.0
      %679 = vmatprep.subr.mxu0 0.0
      %680 = vmatpush1.msra.mxu0 0.0
      %681 = vmatprep.subr.mxu0 0.0
      %682 = vmatpush1.msra.mxu0 0.0
      %683 = vmatprep.subr.mxu0 0.0
      %684 = vmatpush1.msra.mxu0 0.0
      %685 = vmatprep.subr.mxu0 0.0
      %686 = vmatpush1.msra.mxu0 0.0
      %687 = vmatprep.subr.mxu0 0.0
      %688 = vmatpush1.msra.mxu0 0.0
      %689 = vmatprep.subr.mxu0 0.0
      %690 = vmatpush1.msra.mxu0 0.0
      %691 = vmatprep.subr.mxu0 0.0
      %692 = vmatpush1.msra.mxu0 0.0
      %693 = vmatprep.subr.mxu0 0.0
      %694 = vmatpush1.msra.mxu0 0.0
      %695 = vmatprep.subr.mxu0 0.0
      %696 = vmatpush1.msra.mxu0 0.0
      %697 = vmatprep.subr.mxu0 0.0
      %698 = vmatpush1.msra.mxu0 0.0
      %699 = vmatprep.subr.mxu0 0.0
      %700 = vmatpush1.msra.mxu0 0.0
      %701 = vmatprep.subr.mxu0 0.0
      %702 = vmatpush1.msra.mxu0 0.0
      %703 = vmatprep.subr.mxu0 0.0
      %704 = vmatpush1.msra.mxu0 0.0
      %705 = vmatprep.subr.mxu0 0.0
      %706 = vmatpush1.msra.mxu0 0.0
      %707 = vmatprep.subr.mxu0 0.0
      %708 = vmatpush1.msra.mxu0 0.0
      %709 = vmatprep.subr.mxu0 0.0
      %710 = vmatpush1.msra.mxu0 0.0
      %711 = vmatprep.subr.mxu0 0.0
      %712 = vmatpush1.msra.mxu0 0.0
      %713 = vmatprep.subr.mxu0 0.0
      %714 = vmatpush1.msra.mxu0 0.0
      %715 = vmatprep.subr.mxu0 0.0
      %716 = vmatpush1.msra.mxu0 0.0
      %717 = vmatprep.subr.mxu0 0.0
      %718 = vmatpush1.msra.mxu0 0.0
      %719 = vmatprep.subr.mxu0 0.0
      %720 = vmatpush1.msra.mxu0 0.0
      %721 = vmatprep.subr.mxu0 0.0
      %722 = vmatpush1.msra.mxu0 0.0
      %723 = vmatprep.subr.mxu0 0.0
      %724 = vmatpush1.msra.mxu0 0.0
      %725 = vmatprep.subr.mxu0 0.0
      %726 = vmatpush1.msra.mxu0 0.0
      %727 = vmatprep.mubr.f32.mxu0 0.0
      %728 = vmatmul.mubr.f32.gmra.mrb[0].mxu0 %v658
      %v729 = vpop.f32.mrb[0].mxu0
      %v730 = vadd.f32 %v654, %v729
      %v731 = vpop.f32.mrb[0].mxu0
      %732 = vmatprep.mubr.f32.mxu0 0.0
      %733 = vmatmul.mubr.f32.gmra.mrb[0].mxu0 %v661
      %v734 = vpop.f32.mrb[0].mxu0
      %v735 = vadd.f32 %v654, %v734
      %v736 = vpop.f32.mrb[0].mxu0
      %737 = vdwg.mxu0
      %v738 = vld [vmem:[%s7] sm:$0xff]
      %v739 = vld [vmem:[%s7 + $0x8] sm:$0xff]
      %v740 = vld [vmem:[%s8] sm:$0x1]
      %v742 = vlaneseq
      %v743 = vshrl.u32 %v742, 7
      %v744 = vsub.s32 0, %v743
      %v745 = vrot.slane %v740, %v744
      %vm747 = vcmask 130048
      %v749 = vsel %vm747, %v730, 0
      %v752 = vsel %vm747, %v735, 0
      %754 = vmatprep.subr.mxu0 0.0
      %755 = vmatpush1.msra.mxu0 %v738
      %756 = vmatprep.subr.mxu0 0.0
      %757 = vmatpush1.msra.mxu0 %v739
      %758 = vmatprep.subr.mxu0 0.0
      %759 = vmatpush1.msra.mxu0 0.0
      %760 = vmatprep.subr.mxu0 0.0
      %761 = vmatpush1.msra.mxu0 0.0
      %762 = vmatprep.subr.mxu0 0.0
      %763 = vmatpush1.msra.mxu0 0.0
      %764 = vmatprep.subr.mxu0 0.0
      %765 = vmatpush1.msra.mxu0 0.0
      %766 = vmatprep.subr.mxu0 0.0
      %767 = vmatpush1.msra.mxu0 0.0
      %768 = vmatprep.subr.mxu0 0.0
      %769 = vmatpush1.msra.mxu0 0.0
      %770 = vmatprep.subr.mxu0 0.0
      %771 = vmatpush1.msra.mxu0 0.0
      %772 = vmatprep.subr.mxu0 0.0
      %773 = vmatpush1.msra.mxu0 0.0
      %774 = vmatprep.subr.mxu0 0.0
      %775 = vmatpush1.msra.mxu0 0.0
      %776 = vmatprep.subr.mxu0 0.0
      %777 = vmatpush1.msra.mxu0 0.0
      %778 = vmatprep.subr.mxu0 0.0
      %779 = vmatpush1.msra.mxu0 0.0
      %780 = vmatprep.subr.mxu0 0.0
      %781 = vmatpush1.msra.mxu0 0.0
      %782 = vmatprep.subr.mxu0 0.0
      %783 = vmatpush1.msra.mxu0 0.0
      %784 = vmatprep.subr.mxu0 0.0
      %785 = vmatpush1.msra.mxu0 0.0
      %786 = vmatprep.subr.mxu0 0.0
      %787 = vmatpush1.msra.mxu0 0.0
      %788 = vmatprep.subr.mxu0 0.0
      %789 = vmatpush1.msra.mxu0 0.0
      %790 = vmatprep.subr.mxu0 0.0
      %791 = vmatpush1.msra.mxu0 0.0
      %792 = vmatprep.subr.mxu0 0.0
      %793 = vmatpush1.msra.mxu0 0.0
      %794 = vmatprep.subr.mxu0 0.0
      %795 = vmatpush1.msra.mxu0 0.0
      %796 = vmatprep.subr.mxu0 0.0
      %797 = vmatpush1.msra.mxu0 0.0
      %798 = vmatprep.subr.mxu0 0.0
      %799 = vmatpush1.msra.mxu0 0.0
      %800 = vmatprep.subr.mxu0 0.0
      %801 = vmatpush1.msra.mxu0 0.0
      %802 = vmatprep.subr.mxu0 0.0
      %803 = vmatpush1.msra.mxu0 0.0
      %804 = vmatprep.subr.mxu0 0.0
      %805 = vmatpush1.msra.mxu0 0.0
      %806 = vmatprep.subr.mxu0 0.0
      %807 = vmatpush1.msra.mxu0 0.0
      %808 = vmatprep.subr.mxu0 0.0
      %809 = vmatpush1.msra.mxu0 0.0
      %810 = vmatprep.subr.mxu0 0.0
      %811 = vmatpush1.msra.mxu0 0.0
      %812 = vmatprep.subr.mxu0 0.0
      %813 = vmatpush1.msra.mxu0 0.0
      %814 = vmatprep.subr.mxu0 0.0
      %815 = vmatpush1.msra.mxu0 0.0
      %816 = vmatprep.subr.mxu0 0.0
      %817 = vmatpush1.msra.mxu0 0.0
      %818 = vmatprep.mubr.f32.mxu0 0.0
      %819 = vmatmul.mubr.f32.gmra.mrb[0].mxu0 %v749
      %v820 = vpop.f32.mrb[0].mxu0
      %v821 = vadd.f32 %v745, %v820
      %v822 = vpop.f32.mrb[0].mxu0
      %823 = vmatprep.mubr.f32.mxu0 0.0
      %824 = vmatmul.mubr.f32.gmra.mrb[0].mxu0 %v752
      %v825 = vpop.f32.mrb[0].mxu0
      %v826 = vadd.f32 %v745, %v825
      %v827 = vpop.f32.mrb[0].mxu0
      %828 = vdwg.mxu0
      %v829 = vmax.f32 %v821, 0.0
      %v830 = vmax.f32 %v826, 0.0
      %v831 = vld [vmem:[%s9] sm:$0xff]
      %v832 = vld [vmem:[%s9 + $0x8] sm:$0xff]
      %v833 = vld [vmem:[%s9 + $0x10] sm:$0xff]
      %v834 = vld [vmem:[%s9 + $0x18] sm:$0xff]
      %v835 = vld [vmem:[%s10] sm:$0x1]
      %v837 = vlaneseq
      %v838 = vshrl.u32 %v837, 7
      %v839 = vsub.s32 0, %v838
      %v840 = vrot.slane %v835, %v839
      %v843 = vsel %vm656, %v829, 0
      %v846 = vsel %vm656, %v830, 0
      %848 = vmatprep.subr.mxu0 0.0
      %849 = vmatpush1.msra.mxu0 %v831
      %850 = vmatprep.subr.mxu0 0.0
      %851 = vmatpush1.msra.mxu0 %v832
      %852 = vmatprep.subr.mxu0 0.0
      %853 = vmatpush1.msra.mxu0 %v833
      %854 = vmatprep.subr.mxu0 0.0
      %855 = vmatpush1.msra.mxu0 %v834
      %856 = vmatprep.subr.mxu0 0.0
      %857 = vmatpush1.msra.mxu0 0.0
      %858 = vmatprep.subr.mxu0 0.0
      %859 = vmatpush1.msra.mxu0 0.0
      %860 = vmatprep.subr.mxu0 0.0
      %861 = vmatpush1.msra.mxu0 0.0
      %862 = vmatprep.subr.mxu0 0.0
      %863 = vmatpush1.msra.mxu0 0.0
      %864 = vmatprep.subr.mxu0 0.0
      %865 = vmatpush1.msra.mxu0 0.0
      %866 = vmatprep.subr.mxu0 0.0
      %867 = vmatpush1.msra.mxu0 0.0
      %868 = vmatprep.subr.mxu0 0.0
      %869 = vmatpush1.msra.mxu0 0.0
      %870 = vmatprep.subr.mxu0 0.0
      %871 = vmatpush1.msra.mxu0 0.0
      %872 = vmatprep.subr.mxu0 0.0
      %873 = vmatpush1.msra.mxu0 0.0
      %874 = vmatprep.subr.mxu0 0.0
      %875 = vmatpush1.msra.mxu0 0.0
      %876 = vmatprep.subr.mxu0 0.0
      %877 = vmatpush1.msra.mxu0 0.0
      %878 = vmatprep.subr.mxu0 0.0
      %879 = vmatpush1.msra.mxu0 0.0
      %880 = vmatprep.subr.mxu0 0.0
      %881 = vmatpush1.msra.mxu0 0.0
      %882 = vmatprep.subr.mxu0 0.0
      %883 = vmatpush1.msra.mxu0 0.0
      %884 = vmatprep.subr.mxu0 0.0
      %885 = vmatpush1.msra.mxu0 0.0
      %886 = vmatprep.subr.mxu0 0.0
      %887 = vmatpush1.msra.mxu0 0.0
      %888 = vmatprep.subr.mxu0 0.0
      %889 = vmatpush1.msra.mxu0 0.0
      %890 = vmatprep.subr.mxu0 0.0
      %891 = vmatpush1.msra.mxu0 0.0
      %892 = vmatprep.subr.mxu0 0.0
      %893 = vmatpush1.msra.mxu0 0.0
      %894 = vmatprep.subr.mxu0 0.0
      %895 = vmatpush1.msra.mxu0 0.0
      %896 = vmatprep.subr.mxu0 0.0
      %897 = vmatpush1.msra.mxu0 0.0
      %898 = vmatprep.subr.mxu0 0.0
      %899 = vmatpush1.msra.mxu0 0.0
      %900 = vmatprep.subr.mxu0 0.0
      %901 = vmatpush1.msra.mxu0 0.0
      %902 = vmatprep.subr.mxu0 0.0
      %903 = vmatpush1.msra.mxu0 0.0
      %904 = vmatprep.subr.mxu0 0.0
      %905 = vmatpush1.msra.mxu0 0.0
      %906 = vmatprep.subr.mxu0 0.0
      %907 = vmatpush1.msra.mxu0 0.0
      %908 = vmatprep.subr.mxu0 0.0
      %909 = vmatpush1.msra.mxu0 0.0
      %910 = vmatprep.subr.mxu0 0.0
      %911 = vmatpush1.msra.mxu0 0.0
      %912 = vmatprep.mubr.f32.mxu0 0.0
      %913 = vmatmul.mubr.f32.gmra.mrb[0].mxu0 %v843
      %v914 = vpop.f32.mrb[0].mxu0
      %v915 = vadd.f32 %v840, %v914
      %v916 = vpop.f32.mrb[0].mxu0
      %917 = vmatprep.mubr.f32.mxu0 0.0
      %918 = vmatmul.mubr.f32.gmra.mrb[0].mxu0 %v846
      %v919 = vpop.f32.mrb[0].mxu0
      %v920 = vadd.f32 %v840, %v919
      %v921 = vpop.f32.mrb[0].mxu0
      %922 = vdwg.mxu0
      %v923 = vmax.f32 %v915, 0.0
      %v924 = vmax.f32 %v920, 0.0
      %v925 = vld [vmem:[%s11] sm:$0xff]
      %v926 = vld [vmem:[%s11 + $0x8] sm:$0xff]
      %v927 = vld [vmem:[%s11 + $0x10] sm:$0xff]
      %v928 = vld [vmem:[%s11 + $0x18] sm:$0xff]
      %v929 = vld [vmem:[%s11 + $0x20] sm:$0xff]
      %v930 = vld [vmem:[%s11 + $0x28] sm:$0xff]
      %v931 = vld [vmem:[%s11 + $0x30] sm:$0xff]
      %v932 = vld [vmem:[%s11 + $0x38] sm:$0xff]
      %v933 = vld [vmem:[%s12] sm:$0x1]
      %v935 = vlaneseq
      %v936 = vshrl.u32 %v935, 7
      %v937 = vsub.s32 0, %v936
      %v938 = vrot.slane %v933, %v937
      %v941 = vsel %vm561, %v923, 0
      %v944 = vsel %vm561, %v924, 0
      %946 = vmatprep.subr.mxu0 0.0
      %947 = vmatpush1.msra.mxu0 %v925
      %948 = vmatprep.subr.mxu0 0.0
      %949 = vmatpush1.msra.mxu0 %v926
      %950 = vmatprep.subr.mxu0 0.0
      %951 = vmatpush1.msra.mxu0 %v927
      %952 = vmatprep.subr.mxu0 0.0
      %953 = vmatpush1.msra.mxu0 %v928
      %954 = vmatprep.subr.mxu0 0.0
      %955 = vmatpush1.msra.mxu0 %v929
      %956 = vmatprep.subr.mxu0 0.0
      %957 = vmatpush1.msra.mxu0 %v930
      %958 = vmatprep.subr.mxu0 0.0
      %959 = vmatpush1.msra.mxu0 %v931
      %960 = vmatprep.subr.mxu0 0.0
      %961 = vmatpush1.msra.mxu0 %v932
      %962 = vmatprep.subr.mxu0 0.0
      %963 = vmatpush1.msra.mxu0 0.0
      %964 = vmatprep.subr.mxu0 0.0
      %965 = vmatpush1.msra.mxu0 0.0
      %966 = vmatprep.subr.mxu0 0.0
      %967 = vmatpush1.msra.mxu0 0.0
      %968 = vmatprep.subr.mxu0 0.0
      %969 = vmatpush1.msra.mxu0 0.0
      %970 = vmatprep.subr.mxu0 0.0
      %971 = vmatpush1.msra.mxu0 0.0
      %972 = vmatprep.subr.mxu0 0.0
      %973 = vmatpush1.msra.mxu0 0.0
      %974 = vmatprep.subr.mxu0 0.0
      %975 = vmatpush1.msra.mxu0 0.0
      %976 = vmatprep.subr.mxu0 0.0
      %977 = vmatpush1.msra.mxu0 0.0
      %978 = vmatprep.subr.mxu0 0.0
      %979 = vmatpush1.msra.mxu0 0.0
      %980 = vmatprep.subr.mxu0 0.0
      %981 = vmatpush1.msra.mxu0 0.0
      %982 = vmatprep.subr.mxu0 0.0
      %983 = vmatpush1.msra.mxu0 0.0
      %984 = vmatprep.subr.mxu0 0.0
      %985 = vmatpush1.msra.mxu0 0.0
      %986 = vmatprep.subr.mxu0 0.0
      %987 = vmatpush1.msra.mxu0 0.0
      %988 = vmatprep.subr.mxu0 0.0
      %989 = vmatpush1.msra.mxu0 0.0
      %990 = vmatprep.subr.mxu0 0.0
      %991 = vmatpush1.msra.mxu0 0.0
      %992 = vmatprep.subr.mxu0 0.0
      %993 = vmatpush1.msra.mxu0 0.0
      %994 = vmatprep.subr.mxu0 0.0
      %995 = vmatpush1.msra.mxu0 0.0
      %996 = vmatprep.subr.mxu0 0.0
      %997 = vmatpush1.msra.mxu0 0.0
      %998 = vmatprep.subr.mxu0 0.0
      %999 = vmatpush1.msra.mxu0 0.0
      %1000 = vmatprep.subr.mxu0 0.0
      %1001 = vmatpush1.msra.mxu0 0.0
      %1002 = vmatprep.subr.mxu0 0.0
      %1003 = vmatpush1.msra.mxu0 0.0
      %1004 = vmatprep.subr.mxu0 0.0
      %1005 = vmatpush1.msra.mxu0 0.0
      %1006 = vmatprep.subr.mxu0 0.0
      %1007 = vmatpush1.msra.mxu0 0.0
      %1008 = vmatprep.subr.mxu0 0.0
      %1009 = vmatpush1.msra.mxu0 0.0
      %1010 = vmatprep.mubr.f32.mxu0 0.0
      %1011 = vmatmul.mubr.f32.gmra.mrb[0].mxu0 %v941
      %v1012 = vpop.f32.mrb[0].mxu0
      %v1013 = vadd.f32 %v938, %v1012
      %v1014 = vpop.f32.mrb[0].mxu0
      %1015 = vmatprep.mubr.f32.mxu0 0.0
      %1016 = vmatmul.mubr.f32.gmra.mrb[0].mxu0 %v944
      %v1017 = vpop.f32.mrb[0].mxu0
      %v1018 = vadd.f32 %v938, %v1017
      %v1019 = vpop.f32.mrb[0].mxu0
      %1020 = vdwg.mxu0
      %v1021 = vsub.f32 0.0, %v1013
      %v1022 = vsub.f32 0.0, %v1018
      %v1023 = vmul.f32 %v1021, 1.442695
      %v1024 = vpow.pop %v1023
      %v1025 = vmul.f32 %v1022, 1.442695
      %v1026 = vpow.pop %v1025
      %v1027 = vadd.f32 %v1024, 1.0
      %v1028 = vadd.f32 %v1026, 1.0
      %v1029 = vrcp.pop %v1027
      %v1030 = vrcp.pop %v1028
      %1031 = vst [vmem:[%s442] sm:$0xff] %v1029
      %1032 = vst [vmem:[%s442 + $0x8] sm:$0xff] %v1030
      %s1033 = smul.u32 2, %s24
      %p1034 = scmp.lt.s32.totalorder %s1033, 3
      %s1035 = scalar_select %p1034, %s1033, 3
      %s1036 = smul.addr %s1035, 8
      %s1037 = scalar_lea.vmem %s13, %s1036
      // Predicated region
      $region73: #{autoencoder_forward.1} parent=71 // pred_check
        %p1038 = pneg %p320
      $region74: #{autoencoder_forward.1} parent=71 // pred_check_branch
        %1040 = sbr.rel (%p1038) target = $region76
      $region75: #{autoencoder_forward.1} parent=71 // pred_region
        %s1041 = smul.u32 2, %s24
      $region76: #{autoencoder_forward.1} parent=71 // pred_fallthru
        _
    $region72: #{autoencoder_forward.1} parent=5 // pred_fallthru
      _
    %p1042 = scmp.le.s32.totalorder 2, %s19
    // Predicated region
    $region77: #{autoencoder_forward.1} parent=5 // pred_check
      %p1043 = pneg %p1042
    $region78: #{autoencoder_forward.1} parent=5 // pred_check_branch
      %1045 = sbr.rel (%p1043) target = $region80
    $region79: #{autoencoder_forward.1} parent=5 // pred_region
      %s1046 = ssub.s32 %s19, 2
      // Predicated region
      $region81: #{autoencoder_forward.1} parent=79 // pred_check
        %p1047 = pneg %p326
      $region82: #{autoencoder_forward.1} parent=79 // pred_check_branch
        %1049 = sbr.rel (%p1047) target = $region84
      $region83: #{autoencoder_forward.1} parent=79 // pred_region
        %s1050 = smul.u32 2, %s25
        %p1051 = scmp.lt.s32.totalorder %s1050, 3
        %s1052 = scalar_select %p1051, %s1050, 3
        %s1053 = smul.addr %s1052, 8
        %s1054 = scalar_lea.vmem %s13, %s1053
      $region84: #{autoencoder_forward.1} parent=79 // pred_fallthru
        _
    $region80: #{autoencoder_forward.1} parent=5 // pred_fallthru
      _
  $region6: #{autoencoder_forward.1} parent=0 // loop_footer
    %s23 = sadd.s32 1, %s19
  $region7: #{autoencoder_forward.1} parent=0 // loop_footer_branch
    %18 = sbr.rel target = $region3
  $region8: #{autoencoder_forward.1} parent=0 // loop_exit
    _

</llo_original>
